<compile_context>
chip_gen: v7x
topology: tpu7x:2x2x1
jax: 0.10.0
libtpu: 0.0.40
codegen_flags: <defaults>
</compile_context>

<pallas_src>
import jax
import jax.numpy as jnp
from jax.experimental import pallas as pl
from jax.experimental.pallas import tpu as pltpu


def _salt_pepper_kernel(x_ref, m_ref, o_ref):
    # x_ref: (TB, HT) block of flattened (image, channel) planes, native dtype.
    # m_ref: (1, HT) soft-mask row (f32), broadcast over the TB sublanes.
    # Fused widen + multiply + clamp + narrow, matches (img * mask).clamp(0,1).
    x = x_ref[...].astype(jnp.float32)
    o_ref[...] = jnp.clip(x * m_ref[...], 0.0, 1.0).astype(o_ref.dtype)


def _round_up(x: int, m: int) -> int:
    return (x + m - 1) // m * m


def _build_soft_mask(key, hw: int, num_noisy: int, noise_prob: float,
                     prob: float) -> jax.Array:
    """Host-side construction of the (1, HW) f32 soft mask (tiny)."""
    k_apply, k_perm, k_vals = jax.random.split(key, 3)

    ones = jnp.ones((hw,), jnp.float32)
    if num_noisy > 0:
        perm = jax.random.permutation(k_perm, hw)            # randperm(H*W)
        idx = perm[:num_noisy]                               # noisy positions
        rnd = jax.random.uniform(k_vals, (num_noisy,))       # per-position u
        vals = jnp.where(rnd < noise_prob, 1.0, 0.0).astype(jnp.float32)
        noisy_mask = ones.at[idx].set(vals)                  # scatter salt/pepper
    else:
        noisy_mask = ones

    # "if random.uniform(0,1) < prob: apply noise" folded into the mask.
    apply_noise = jax.random.uniform(k_apply, ()) < prob
    mask = jnp.where(apply_noise, noisy_mask, ones)
    return mask.reshape(1, hw)


def salt_pepper_forward(marked_img: jax.Array,
                        key: jax.Array,
                        noise_ratio: float = 0.1,
                        noise_prob: float = 0.5,
                        prob: float = 0.8,
                        max_step: int = 100,
                        now_step: int = 0) -> jax.Array:
    """SaltPepperNoise.forward: marked_img is (N, C, H, W), values in [0, 1]."""
    noise_prob = max(min(noise_prob, 1.0), 0.0)
    noise_ratio = max(min(noise_ratio, 1.0), 0.0)
    prob = max(min(prob, 1.0), 0.0)
    max_step = max(max_step, 1)

    N, C, H, W = marked_img.shape
    NC, HW = N * C, H * W
    dtype = marked_img.dtype
    dsize = jnp.dtype(dtype).itemsize

    # Dynamic ratio (static Python numbers -> static mask size).
    _noise_ratio = min(now_step / max_step, 1.0) * noise_ratio
    num_noisy = int(_noise_ratio * HW)

    # ---- host-side padding to (8, 128)-aligned tiles (no-op if aligned) ----
    HW_pad = _round_up(HW, 128)
    NC_pad = _round_up(NC, 8)

    mask = _build_soft_mask(key, HW, num_noisy, noise_prob, prob)   # (1, HW)
    if HW_pad != HW:
        mask = jnp.pad(mask, ((0, 0), (0, HW_pad - HW)), constant_values=1.0)

    x2 = marked_img.reshape(NC, HW)
    if NC_pad != NC or HW_pad != HW:
        x2 = jnp.pad(x2, ((0, NC_pad - NC), (0, HW_pad - HW)))

    # ---- VMEM-aware tile sizing --------------------------------------------
    # Target <= ~2 MiB per block: with double-buffered input + output that is
    # <= ~8 MiB of pipeline buffers, safe on v5e/v6e/v7x scoped-VMEM defaults.
    block_budget = 2 << 20  # bytes

    # Lane tile HT: multiple of 128, divisor of HW_pad, 8*HT block <= budget.
    n_lane_units = HW_pad // 128
    lane_limit = max(1, block_budget // (8 * 128 * dsize))
    HT_units = 1
    for d in range(1, n_lane_units + 1):
        if n_lane_units % d == 0 and d <= lane_limit:
            HT_units = d
    HT = HT_units * 128
    n_col_blocks = HW_pad // HT

    # Row tile TB: multiple of 8, divisor of NC_pad, TB*HT block <= budget.
    n_row_units = NC_pad // 8
    row_limit = max(1, block_budget // (8 * HT * dsize))
    if n_col_blocks == 1 and n_row_units >= 2:
        # Guarantee >= 2 grid steps so v7x can shard the stream over both TCs.
        row_limit = min(row_limit, n_row_units // 2)
    TB_units = 1
    for d in range(1, n_row_units + 1):
        if n_row_units % d == 0 and d <= row_limit:
            TB_units = d
    TB = TB_units * 8

    grid = (NC_pad // TB, HW_pad // HT)

    out = pl.pallas_call(
        _salt_pepper_kernel,
        out_shape=jax.ShapeDtypeStruct((NC_pad, HW_pad), dtype),
        grid_spec=pltpu.PrefetchScalarGridSpec(
            num_scalar_prefetch=0,
            grid=grid,
            in_specs=[
                pl.BlockSpec((TB, HT), lambda i, j: (i, j)),   # image planes
                pl.BlockSpec((1, HT), lambda i, j: (0, j)),    # shared mask row
            ],
            out_specs=pl.BlockSpec((TB, HT), lambda i, j: (i, j)),
        ),
        compiler_params=pltpu.CompilerParams(
            dimension_semantics=("parallel", "parallel"),
            vmem_limit_bytes=32 * 1024 * 1024,
        ),
        cost_estimate=pl.CostEstimate(
            flops=2 * NC_pad * HW_pad,
            transcendentals=0,
            bytes_accessed=2 * NC_pad * HW_pad * dsize + HW_pad * 4,
        ),
    )(x2, mask)

    # Drop padding (no-op slice if nothing was padded) and restore shape/dtype.
    return out[:NC, :HW].reshape(N, C, H, W)


if __name__ == "__main__":
    key = jax.random.PRNGKey(0)
    k_img, k_noise = jax.random.split(key)

    # Small (N, C, H, W) input consistent with the module's contract.
    x = jax.random.uniform(k_img, (2, 4, 16, 16), dtype=jnp.float32)

    # now_step = max_step -> full noise_ratio, exercising the noisy path.
    y = salt_pepper_forward(x, k_noise, noise_ratio=0.1, noise_prob=0.5,
                            prob=0.8, max_step=100, now_step=100)
    jax.block_until_ready(y)

    assert y.shape == x.shape and y.dtype == x.dtype
    assert bool(jnp.all(jnp.isfinite(y)))
    assert bool(jnp.all((y >= 0.0) & (y <= 1.0)))
    # Every output pixel is either the (clamped) original or zeroed by pepper.
    assert bool(jnp.all((y == jnp.clip(x, 0.0, 1.0)) | (y == 0.0)))
    print("KERNEL_OK")
</pallas_src>

<mosaic_0001>
module attributes {stable_mosaic.version = 11 : i64} {
  func.func @_salt_pepper_kernel(%arg0: i32, %arg1: i32, %arg2: memref<8x256xf32, #tpu.memory_space<vmem>>, %arg3: memref<1x256xf32, #tpu.memory_space<vmem>>, %arg4: memref<8x256xf32, #tpu.memory_space<vmem>>) attributes {dimension_semantics = [#tpu.dimension_semantics<parallel>, #tpu.dimension_semantics<parallel>], iteration_bounds = array<i64: 1, 1>, scalar_prefetch = 0 : i64, scratch_operands = 0 : i64, tpu.core_type = #tpu.core_type<tc>, window_params = [{transform_indices = @transform_0, window_bounds = array<i64: 8, 256>}, {transform_indices = @transform_1, window_bounds = array<i64: 1, 256>}, {transform_indices = @transform_2, window_bounds = array<i64: 8, 256>}]} {
    %c0 = arith.constant 0 : index
    %c0_0 = arith.constant 0 : index
    %0 = vector.load %arg2[%c0, %c0_0] : memref<8x256xf32, #tpu.memory_space<vmem>>, vector<8x256xf32>
    %c0_1 = arith.constant 0 : index
    %c0_2 = arith.constant 0 : index
    %1 = vector.load %arg3[%c0_1, %c0_2] : memref<1x256xf32, #tpu.memory_space<vmem>>, vector<1x256xf32>
    %2 = vector.broadcast %1 : vector<1x256xf32> to vector<8x256xf32>
    %3 = arith.mulf %0, %2 : vector<8x256xf32>
    %cst = arith.constant 0.000000e+00 : f32
    %cst_3 = arith.constant 1.000000e+00 : f32
    %4 = vector.broadcast %cst : f32 to vector<8x256xf32>
    %5 = arith.maximumf %4, %3 : vector<8x256xf32>
    %6 = vector.broadcast %cst_3 : f32 to vector<8x256xf32>
    %7 = arith.minimumf %6, %5 : vector<8x256xf32>
    %c0_4 = arith.constant 0 : index
    %c0_5 = arith.constant 0 : index
    %8 = vector.load %arg4[%c0_4, %c0_5] : memref<8x256xf32, #tpu.memory_space<vmem>>, vector<8x256xf32>
    tpu.vector_store %arg4[%c0_4, %c0_5], %7 {strides = array<i32>} : memref<8x256xf32, #tpu.memory_space<vmem>>, vector<8x256xf32>,
    return
  }
  func.func @transform_0(%arg0: i32, %arg1: i32) -> (i32, i32) {
    %c0_i32 = arith.constant 0 : i32
    return %arg0, %arg1 : i32, i32
  }
  func.func @transform_1(%arg0: i32, %arg1: i32) -> (i32, i32) {
    %c0_i32 = arith.constant 0 : i32
    %c0_i32_0 = arith.constant 0 : i32
    return %c0_i32, %arg1 : i32, i32
  }
  func.func @transform_2(%arg0: i32, %arg1: i32) -> (i32, i32) {
    %c0_i32 = arith.constant 0 : i32
    return %arg0, %arg1 : i32, i32
  }
}

</mosaic_0001>

<llo_original>
// kernel: tpu_custom_call.1
$region0: #{tpu_custom_call.1}
  #allocation0 [shape = 'u32[]', space=smem, size = 0x4, offset = 0x4, fixed_abs, tag = 'smem constant byte address 0x4 - core index']
  #allocation1 [shape = 'u32[144,128]{1,0:T(1,128)}', space=vmem, size = 0x12000, scoped, tag = 'internal scratch']
  %s0 = inlined_call_operand.hbm [shape: f32[8,256], index: 0, kind: input, shape index: {}]
  %s1 = inlined_call_operand.vmem [shape: f32[1,256], index: 1, kind: input, shape index: {}]
  %s2 = inlined_call_operand.hbm [shape: f32[8,256], index: 2, kind: output, shape index: {}]
  %s3 = sld [smem:[#allocation0]]
  $region22: #{tpu_custom_call.1} parent=0
    _
  %s5 = ssub.s32 1, %s3
  %s6 = scalar_select 0, %s5, %s3
  $region1: #{tpu_custom_call.1} parent=0
    #allocation2 [shape = 'u8[8192]{0}', space=vmem, size = 0x2000, scoped, tag = 'input window, operand 0, single buffered']
    #allocation3 [shape = 's32[1]{0}', space=sflag, size = 0x4, scoped, tag = 'scoped memory for tpu_custom_call.1']
    #allocation4 [shape = 's32[1]{0}', space=sflag, size = 0x4, scoped, tag = 'scoped memory for tpu_custom_call.1']
    #allocation5 [shape = 'u8[8192]{0}', space=vmem, size = 0x2000, scoped, tag = 'output window, operand 0, single buffered']
    %7 = vsyncpa [#allocation3], 0
    %8 = vsyncpa [#allocation4], 0
    // Predicated region
    $region2: #{tpu_custom_call.1} parent=1 // pred_check
      _
    $region3: #{tpu_custom_call.1} parent=1 // pred_check_branch
      %10 = sbr.rel (0) target = $region5
    $region4: #{tpu_custom_call.1} parent=1 // pred_region
      %s12 = ssub.s32 256, 256
      %13 = vsyncadd [#allocation3], %s12
      %s15 = sshll.u32 [#allocation2], 4
      %s16 = int_to_ptr.vmem [resolvable:$true] %s15
      %18 = dma.hbm_to_vmem [thread:$0]  %s0, 256, %s16, [#allocation3]
    $region5: #{tpu_custom_call.1} parent=1 // pred_fallthru
      _
    // Predicated region
    $region6: #{tpu_custom_call.1} parent=1 // pred_check
      _
    $region7: #{tpu_custom_call.1} parent=1 // pred_check_branch
      %20 = sbr.rel (0) target = $region9
    $region8: #{tpu_custom_call.1} parent=1 // pred_region
      _
    $region9: #{tpu_custom_call.1} parent=1 // pred_fallthru
      _
    // Predicated region
    $region10: #{tpu_custom_call.1} parent=1 // pred_check
      _
    $region11: #{tpu_custom_call.1} parent=1 // pred_check_branch
      %22 = sbr.rel (0) target = $region13
    $region12: #{tpu_custom_call.1} parent=1 // pred_region
      %23 = dma.done [#allocation3], 256
    $region13: #{tpu_custom_call.1} parent=1 // pred_fallthru
      _
    %v24 = vld [vmem:[#allocation2] sm:$0xff]
    %v25 = vld [vmem:[#allocation2 + $0x8] sm:$0xff]
    %v26 = vld [vmem:[%s1] sm:$0x3]
    %v28 = vlaneseq
    %v29 = vshrl.u32 %v28, 7
    %v30 = vsub.s32 0, %v29
    %v31 = vrot.slane %v26, %v30
    %v32 = vlaneseq
    %v33 = vshrl.u32 %v32, 7
    %v34 = vsub.s32 1, %v33
    %v35 = vrot.slane %v26, %v34
    %v38 = vmul.f32 %v24, %v31
    %v39 = vmul.f32 %v25, %v35
    %v40 = vmax.f32 %v38, 0.0
    %v41 = vmax.f32 %v39, 0.0
    %v42 = vmin.f32 %v40, 1.0
    %v43 = vmin.f32 %v41, 1.0
    %44 = vst [vmem:[#allocation5] sm:$0xff] %v42
    %45 = vst [vmem:[#allocation5 + $0x8] sm:$0xff] %v43
    // Predicated region
    $region14: #{tpu_custom_call.1} parent=1 // pred_check
      _
    $region15: #{tpu_custom_call.1} parent=1 // pred_check_branch
      %47 = sbr.rel (0) target = $region17
    $region16: #{tpu_custom_call.1} parent=1 // pred_region
      %s49 = ssub.s32 256, 256
      %50 = vsyncadd [#allocation4], %s49
      %s52 = sshll.u32 [#allocation5], 4
      %s53 = int_to_ptr.vmem [resolvable:$true] %s52
      %55 = dma.vmem_to_hbm [thread:$0]  %s53, 256, %s2, [#allocation4]
    $region17: #{tpu_custom_call.1} parent=1 // pred_fallthru
      _
    // Predicated region
    $region18: #{tpu_custom_call.1} parent=1 // pred_check
      _
    $region19: #{tpu_custom_call.1} parent=1 // pred_check_branch
      %57 = sbr.rel (0) target = $region21
    $region20: #{tpu_custom_call.1} parent=1 // pred_region
      %58 = dma.done [#allocation4], 256
    $region21: #{tpu_custom_call.1} parent=1 // pred_fallthru
      _
    %59 = vsyncpa [#allocation3], 1
    %60 = vsyncpa [#allocation4], 1

</llo_original>
